<compile_context>
chip_gen: v7x
topology: tpu7x:2x2x1
jax: 0.10.0
libtpu: 0.0.40
codegen_flags: <defaults>
</compile_context>

<pallas_src>
import functools

import jax
import jax.numpy as jnp
import numpy as np
from jax.experimental import pallas as pl
from jax.experimental.pallas import tpu as pltpu


_SMALL_N_THRESHOLD = 1024            # below this, plain jnp beats a kernel launch
_MAX_TILE_N = 32768                  # lanes per grid step, upper cap
_VMEM_LIMIT_BYTES = 32 * 1024 * 1024  # safe on v5e/v6e (128 MiB) and v7x (64 MiB)


def _round_up(x, m):
    return ((x + m - 1) // m) * m


@functools.lru_cache(maxsize=None)
def _vmem_capacity_bytes():
    try:
        return int(pltpu.get_tpu_info().vmem_capacity_bytes)
    except Exception:
        return 64 * 1024 * 1024      # conservative default (v7x per-core VMEM)


@functools.lru_cache(maxsize=None)
def _pick_tile_n(num_classes):
    """Largest lane tile whose (C, TILE_N) int32 intermediates stay in VMEM.

    Budget ~6 live (C, TILE_N) int32/bool temporaries + double-buffered
    (1, TILE_N) inputs well under the scoped-VMEM limit; tighter budget on v7x.
    """
    phys = _vmem_capacity_bytes()
    inter_budget = 16 * 1024 * 1024 if phys >= (100 << 20) else 8 * 1024 * 1024
    per_lane_bytes = 6 * 4 * max(int(num_classes), 8)
    tile = inter_budget // per_lane_bytes
    tile = max(512, min(_MAX_TILE_N, (tile // 128) * 128))
    return int(tile)


def _confusion_kernel(yp_ref, yt_ref, out_ref, acc_ref, *, n, tile_n,
                      steps_per_shard, num_classes):
    """One grid step over a (1, tile_n) slab of class-index labels.

    Grid = (num_shards, steps_per_shard):
      axis 0 ("parallel")  : TensorCore shard; each owns one (C, 3) output block
      axis 1 ("arbitrary") : N-tile reduction accumulated into VMEM scratch

    yp_ref, yt_ref : (1, tile_n) int32 predicted / true class indices.  The
                     trailing block may extend past the true length n; those
                     lanes are masked in-kernel.
    out_ref        : (C, 3) int32 per-shard output [tp, count_true, count_pred]
    acc_ref        : (C, 3) int32 VMEM accumulator (grid-resident per shard)
    """
    shard = pl.program_id(0)
    step = pl.program_id(1)

    @pl.when(step == 0)
    def _():
        acc_ref[...] = jnp.zeros_like(acc_ref)

    # Validity mask: global element index < n (replaces wrapper-side jnp.pad).
    start = (shard * steps_per_shard + step) * tile_n
    pos = start + jax.lax.broadcasted_iota(jnp.int32, (1, tile_n), 1)
    valid = pos < n                                        # (1, tile_n) bool

    # Narrow (C, 1) class iota; broadcasting builds the (C, tile_n) masks.
    cls = jax.lax.broadcasted_iota(jnp.int32, (num_classes, 1), 0)
    oh_pred = (yp_ref[...] == cls) & valid                 # (C, tile_n) bool
    oh_true = (yt_ref[...] == cls) & valid                 # (C, tile_n) bool

    tp = jnp.sum((oh_pred & oh_true).astype(jnp.int32), axis=-1, keepdims=True)
    ct = jnp.sum(oh_true.astype(jnp.int32), axis=-1, keepdims=True)
    cp = jnp.sum(oh_pred.astype(jnp.int32), axis=-1, keepdims=True)

    # Single accumulator read-modify-write per step (instead of three).
    lane = jax.lax.broadcasted_iota(jnp.int32, (num_classes, 3), 1)
    acc_ref[...] += jnp.where(lane == 0, tp, jnp.where(lane == 1, ct, cp))

    @pl.when(step == pl.num_programs(1) - 1)
    def _():
        out_ref[...] = acc_ref[...]


def _confusion_counts_pallas(y_pred, y_true, *, num_classes, tile_n):
    n = y_pred.shape[0]
    yp = y_pred.astype(jnp.int32)[None, :]
    yt = y_true.astype(jnp.int32)[None, :]

    total_steps = -(-n // tile_n)
    num_shards = 2 if total_steps >= 2 else 1   # 2 TCs on v7x; harmless on v5e/v6e
    steps_per_shard = -(-total_steps // num_shards)
    last_block = total_steps - 1

    def in_idx(c, i):
        # Clamp so a shard's tail step never issues a fully out-of-bounds DMA;
        # the in-kernel `valid` mask zeroes that step's contribution.
        return (0, jnp.minimum(c * steps_per_shard + i, last_block))

    kernel = functools.partial(
        _confusion_kernel, n=n, tile_n=tile_n,
        steps_per_shard=steps_per_shard, num_classes=num_classes)

    out = pl.pallas_call(
        kernel,
        out_shape=jax.ShapeDtypeStruct((num_shards, num_classes, 3), jnp.int32),
        grid_spec=pltpu.PrefetchScalarGridSpec(
            num_scalar_prefetch=0,
            grid=(num_shards, steps_per_shard),
            in_specs=[
                pl.BlockSpec((1, tile_n), in_idx),
                pl.BlockSpec((1, tile_n), in_idx),
            ],
            out_specs=pl.BlockSpec((None, num_classes, 3), lambda c, i: (c, 0, 0)),
            scratch_shapes=[pltpu.VMEM((num_classes, 3), jnp.int32)],
        ),
        compiler_params=pltpu.CompilerParams(
            dimension_semantics=("parallel", "arbitrary"),
            vmem_limit_bytes=_VMEM_LIMIT_BYTES,
        ),
    )(yp, yt)
    return out.sum(axis=0)                      # combine per-shard partials


def _confusion_counts_jnp(y_pred, y_true, *, num_classes):
    """Fused XLA fallback for tiny batches (kernel launch is pure overhead)."""
    cls = jnp.arange(num_classes, dtype=jnp.int32)[:, None]
    oh_p = y_pred.astype(jnp.int32)[None, :] == cls
    oh_t = y_true.astype(jnp.int32)[None, :] == cls
    tp = jnp.sum(oh_p & oh_t, axis=-1, dtype=jnp.int32)
    ct = jnp.sum(oh_t, axis=-1, dtype=jnp.int32)
    cp = jnp.sum(oh_p, axis=-1, dtype=jnp.int32)
    return jnp.stack([tp, ct, cp], axis=-1)


def confusion_counts(y_pred, y_true, *, num_classes, tile_n=None):
    """Per-class counts [tp, n_true, n_pred] as a (C, 3) int32 array."""
    n = y_pred.shape[0]
    if tile_n is None:
        if n <= _SMALL_N_THRESHOLD:
            return _confusion_counts_jnp(y_pred, y_true, num_classes=num_classes)
        tile_n = _pick_tile_n(num_classes)
    # Never tile wider than the (128-rounded) batch; keep it a lane multiple.
    tile_n = max(128, min(int(tile_n), _round_up(n, 128)))
    tile_n = _round_up(tile_n, 128)
    return _confusion_counts_pallas(y_pred, y_true, num_classes=num_classes,
                                    tile_n=tile_n)


@functools.partial(jax.jit, static_argnames=("num_classes", "epsilon"))
def _update_and_metrics(y_pred, y_true, tp0, tn0, fp0, fn0, *, num_classes, epsilon):
    n = y_pred.shape[0]
    counts = confusion_counts(y_pred, y_true, num_classes=num_classes)
    tp_b = counts[:, 0]
    ct_b = counts[:, 1]          # per-class count of true labels
    cp_b = counts[:, 2]          # per-class count of predicted labels
    fp_b = cp_b - tp_b
    fn_b = ct_b - tp_b
    tn_b = jnp.int32(n) - tp_b - fp_b - fn_b

    tp = tp0 + tp_b
    tn = tn0 + tn_b
    fp = fp0 + fp_b
    fn = fn0 + fn_b

    tpf = tp.astype(jnp.float32)
    tnf = tn.astype(jnp.float32)
    fpf = fp.astype(jnp.float32)
    fnf = fn.astype(jnp.float32)
    eps = jnp.float32(epsilon)

    precision = tpf / (tpf + fpf + eps)
    recall = tpf / (tpf + fnf + eps)
    accuracy = tpf.sum() / (tpf.sum() + tnf.sum() + fpf.sum() + fnf.sum())
    accuracy = accuracy * num_classes
    f1 = 2.0 * (precision * recall) / (precision + recall + eps)

    metrics = jnp.stack([
        accuracy * 100.0,
        precision.mean() * 100.0,
        recall.mean() * 100.0,
        f1.mean() * 100.0,
    ])
    return tp, tn, fp, fn, metrics


class F1ScorePallas:
    """Mirror of the PyTorch F1_score module (stateful accumulation)."""

    def __init__(self, num_classes, epsilon=1e-07):
        self.num_classes = num_classes
        self.epsilon = epsilon
        self.reset()

    def reset(self):
        z = jnp.zeros((self.num_classes,), jnp.int32)
        self.tp, self.tn, self.fp, self.fn = z, z, z, z

    def forward(self, y_pred, y_true):
        assert y_pred.ndim == 1, 'y为正确类别数据'
        assert y_true.ndim == 1
        self.tp, self.tn, self.fp, self.fn, metrics = _update_and_metrics(
            y_pred, y_true, self.tp, self.tn, self.fp, self.fn,
            num_classes=self.num_classes, epsilon=self.epsilon)
        # Single host pull per call (the module returns Python floats).
        m = np.asarray(metrics)
        return float(m[0]), float(m[1]), float(m[2]), float(m[3])

    __call__ = forward


if __name__ == "__main__":
    num_classes = 10
    N = 3000  # > _SMALL_N_THRESHOLD -> Pallas path; not a lane multiple -> edge masking

    key = jax.random.PRNGKey(0)
    k1, k2 = jax.random.split(key)
    y_pred = jax.random.randint(k1, (N,), 0, num_classes, dtype=jnp.int32)
    y_true = jax.random.randint(k2, (N,), 0, num_classes, dtype=jnp.int32)

    # ---- numpy reference (same semantics as the PyTorch module) ----
    yp_np = np.asarray(y_pred)
    yt_np = np.asarray(y_true)
    oh_p = np.eye(num_classes, dtype=np.int64)[yp_np]
    oh_t = np.eye(num_classes, dtype=np.int64)[yt_np]
    ref_tp = (oh_t * oh_p).sum(0)
    ref_tn = ((1 - oh_t) * (1 - oh_p)).sum(0)
    ref_fp = ((1 - oh_t) * oh_p).sum(0)
    ref_fn = (oh_t * (1 - oh_p)).sum(0)

    # 1) Direct kernel check with a small forced tile: exercises multi-step
    #    accumulation, the 2-shard "parallel" split and edge-lane masking.
    counts = jax.block_until_ready(
        confusion_counts(y_pred, y_true, num_classes=num_classes, tile_n=512))
    assert np.array_equal(np.asarray(counts[:, 0]), ref_tp)
    assert np.array_equal(np.asarray(counts[:, 1]), oh_t.sum(0))
    assert np.array_equal(np.asarray(counts[:, 2]), oh_p.sum(0))

    # 2) Module-level check through the default (auto-tiled) Pallas path,
    #    two accumulation steps (state accumulates like the torch module).
    metric = F1ScorePallas(num_classes)
    _ = metric.forward(y_pred, y_true)
    out2 = metric.forward(y_pred, y_true)
    jax.block_until_ready((metric.tp, metric.tn, metric.fp, metric.fn))

    assert np.array_equal(np.asarray(metric.tp), 2 * ref_tp)
    assert np.array_equal(np.asarray(metric.tn), 2 * ref_tn)
    assert np.array_equal(np.asarray(metric.fp), 2 * ref_fp)
    assert np.array_equal(np.asarray(metric.fn), 2 * ref_fn)

    eps = 1e-07
    tp, tn, fp, fn = (2 * ref_tp).astype(np.float64), (2 * ref_tn).astype(np.float64), \
                     (2 * ref_fp).astype(np.float64), (2 * ref_fn).astype(np.float64)
    prec = tp / (tp + fp + eps)
    rec = tp / (tp + fn + eps)
    acc = tp.sum() / (tp.sum() + tn.sum() + fp.sum() + fn.sum()) * num_classes
    f1 = 2 * prec * rec / (prec + rec + eps)
    ref_out2 = (acc * 100.0, prec.mean() * 100.0, rec.mean() * 100.0, f1.mean() * 100.0)
    assert np.allclose(np.asarray(out2), np.asarray(ref_out2), rtol=1e-4, atol=1e-4)

    # 3) Tiny-batch path (fused jnp bypass) sanity check.
    small = F1ScorePallas(num_classes)
    _ = small.forward(y_pred[:16], y_true[:16])
    jax.block_until_ready((small.tp,))
    assert np.array_equal(np.asarray(small.tp), (oh_t[:16] * oh_p[:16]).sum(0))

    print("KERNEL_OK")
</pallas_src>

<mosaic_0001>
module attributes {stable_mosaic.version = 11 : i64} {
  func.func @_confusion_kernel(%arg0: i32, %arg1: i32, %arg2: memref<1x512xi32, #tpu.memory_space<vmem>>, %arg3: memref<1x512xi32, #tpu.memory_space<vmem>>, %arg4: memref<1x10x3xi32, #tpu.memory_space<vmem>>, %arg5: memref<10x3xi32, #tpu.memory_space<vmem>>) attributes {dimension_semantics = [#tpu.dimension_semantics<parallel>, #tpu.dimension_semantics<arbitrary>], iteration_bounds = array<i64: 2, 3>, scalar_prefetch = 0 : i64, scratch_operands = 1 : i64, tpu.core_type = #tpu.core_type<tc>, window_params = [{transform_indices = @transform_0, window_bounds = array<i64: 1, 512>}, {transform_indices = @transform_1, window_bounds = array<i64: 1, 512>}, {transform_indices = @transform_2, window_bounds = array<i64: 1, 10, 3>}]} {
    %c0_i32 = arith.constant 0 : i32
    %0 = arith.cmpi eq, %arg1, %c0_i32 : i32
    %1 = arith.extui %0 : i1 to i32
    %c0_i32_0 = arith.constant 0 : i32
    %2 = arith.cmpi ne, %1, %c0_i32_0 : i32
    scf.if %2 {
      %c0_i32_12 = arith.constant 0 : i32
      %53 = vector.broadcast %c0_i32_12 : i32 to vector<10x3xi32>
      %c0_13 = arith.constant 0 : index
      %c0_14 = arith.constant 0 : index
      %54 = vector.load %arg5[%c0_13, %c0_14] : memref<10x3xi32, #tpu.memory_space<vmem>>, vector<10x3xi32>
      tpu.vector_store %arg5[%c0_13, %c0_14], %53 {strides = array<i32>} : memref<10x3xi32, #tpu.memory_space<vmem>>, vector<10x3xi32>,
    } else {
    }
    %c3_i32 = arith.constant 3 : i32
    %3 = arith.muli %arg0, %c3_i32 : i32
    %4 = arith.addi %3, %arg1 : i32
    %c512_i32 = arith.constant 512 : i32
    %5 = arith.muli %4, %c512_i32 : i32
    %6 = tpu.iota {dimensions = array<i32: 1>} : vector<1x512xi32>
    %7 = vector.broadcast %5 : i32 to vector<1x512xi32>
    %8 = arith.addi %7, %6 : vector<1x512xi32>
    %c3000_i32 = arith.constant 3000 : i32
    %9 = vector.broadcast %c3000_i32 : i32 to vector<1x512xi32>
    %10 = arith.cmpi slt, %8, %9 : vector<1x512xi32>
    %11 = tpu.iota {dimensions = array<i32: 0>} : vector<10x1xi32>
    %c0 = arith.constant 0 : index
    %c0_1 = arith.constant 0 : index
    %12 = vector.load %arg2[%c0, %c0_1] : memref<1x512xi32, #tpu.memory_space<vmem>>, vector<1x512xi32>
    %13 = vector.broadcast %12 : vector<1x512xi32> to vector<10x512xi32>
    %14 = vector.broadcast %11 : vector<10x1xi32> to vector<10x512xi32>
    %15 = arith.cmpi eq, %13, %14 : vector<10x512xi32>
    %16 = vector.broadcast %10 : vector<1x512xi1> to vector<10x512xi1>
    %17 = arith.andi %15, %16 : vector<10x512xi1>
    %c0_2 = arith.constant 0 : index
    %c0_3 = arith.constant 0 : index
    %18 = vector.load %arg3[%c0_2, %c0_3] : memref<1x512xi32, #tpu.memory_space<vmem>>, vector<1x512xi32>
    %19 = vector.broadcast %18 : vector<1x512xi32> to vector<10x512xi32>
    %20 = vector.broadcast %11 : vector<10x1xi32> to vector<10x512xi32>
    %21 = arith.cmpi eq, %19, %20 : vector<10x512xi32>
    %22 = vector.broadcast %10 : vector<1x512xi1> to vector<10x512xi1>
    %23 = arith.andi %21, %22 : vector<10x512xi1>
    %24 = arith.andi %17, %23 : vector<10x512xi1>
    %25 = arith.extui %24 : vector<10x512xi1> to vector<10x512xi32>
    %cst = arith.constant dense<0> : vector<10xi32>
    %26 = vector.multi_reduction <add>, %25, %cst [1] : vector<10x512xi32> to vector<10xi32>
    %27 = vector.shape_cast %26 : vector<10xi32> to vector<10x1xi32>
    %28 = arith.extui %23 : vector<10x512xi1> to vector<10x512xi32>
    %cst_4 = arith.constant dense<0> : vector<10xi32>
    %29 = vector.multi_reduction <add>, %28, %cst_4 [1] : vector<10x512xi32> to vector<10xi32>
    %30 = vector.shape_cast %29 : vector<10xi32> to vector<10x1xi32>
    %31 = arith.extui %17 : vector<10x512xi1> to vector<10x512xi32>
    %cst_5 = arith.constant dense<0> : vector<10xi32>
    %32 = vector.multi_reduction <add>, %31, %cst_5 [1] : vector<10x512xi32> to vector<10xi32>
    %33 = vector.shape_cast %32 : vector<10xi32> to vector<10x1xi32>
    %34 = tpu.iota {dimensions = array<i32: 1>} : vector<10x3xi32>
    %c0_6 = arith.constant 0 : index
    %c0_7 = arith.constant 0 : index
    %35 = vector.load %arg5[%c0_6, %c0_7] : memref<10x3xi32, #tpu.memory_space<vmem>>, vector<10x3xi32>
    %c0_i32_8 = arith.constant 0 : i32
    %36 = vector.broadcast %c0_i32_8 : i32 to vector<10x3xi32>
    %37 = arith.cmpi eq, %34, %36 : vector<10x3xi32>
    %c1_i32 = arith.constant 1 : i32
    %38 = vector.broadcast %c1_i32 : i32 to vector<10x3xi32>
    %39 = arith.cmpi eq, %34, %38 : vector<10x3xi32>
    %40 = vector.shape_cast %30 : vector<10x1xi32> to vector<10x1xi32>
    %41 = vector.broadcast %40 : vector<10x1xi32> to vector<10x3xi32>
    %42 = vector.shape_cast %33 : vector<10x1xi32> to vector<10x1xi32>
    %43 = vector.broadcast %42 : vector<10x1xi32> to vector<10x3xi32>
    %44 = arith.select %39, %41, %43 : vector<10x3xi1>, vector<10x3xi32>
    %45 = vector.shape_cast %27 : vector<10x1xi32> to vector<10x1xi32>
    %46 = vector.broadcast %45 : vector<10x1xi32> to vector<10x3xi32>
    %47 = arith.select %37, %46, %44 : vector<10x3xi1>, vector<10x3xi32>
    %48 = arith.addi %35, %47 : vector<10x3xi32>
    %c0_9 = arith.constant 0 : index
    %c0_10 = arith.constant 0 : index
    %49 = vector.load %arg5[%c0_9, %c0_10] : memref<10x3xi32, #tpu.memory_space<vmem>>, vector<10x3xi32>
    tpu.vector_store %arg5[%c0_9, %c0_10], %48 {strides = array<i32>} : memref<10x3xi32, #tpu.memory_space<vmem>>, vector<10x3xi32>,
    %c2_i32 = arith.constant 2 : i32
    %50 = arith.cmpi eq, %arg1, %c2_i32 : i32
    %51 = arith.extui %50 : i1 to i32
    %c0_i32_11 = arith.constant 0 : i32
    %52 = arith.cmpi ne, %51, %c0_i32_11 : i32
    scf.if %52 {
      %c0_12 = arith.constant 0 : index
      %c0_13 = arith.constant 0 : index
      %53 = vector.load %arg5[%c0_12, %c0_13] : memref<10x3xi32, #tpu.memory_space<vmem>>, vector<10x3xi32>
      %c0_14 = arith.constant 0 : index
      %c0_15 = arith.constant 0 : index
      %c0_16 = arith.constant 0 : index
      %54 = vector.load %arg4[%c0_14, %c0_15, %c0_16] : memref<1x10x3xi32, #tpu.memory_space<vmem>>, vector<1x10x3xi32>
      %55 = vector.shape_cast %54 : vector<1x10x3xi32> to vector<10x3xi32>
      %56 = vector.shape_cast %53 : vector<10x3xi32> to vector<1x10x3xi32>
      tpu.vector_store %arg4[%c0_14, %c0_15, %c0_16], %56 {strides = array<i32>} : memref<1x10x3xi32, #tpu.memory_space<vmem>>, vector<1x10x3xi32>,
    } else {
    }
    return
  }
  func.func @transform_0(%arg0: i32, %arg1: i32) -> (i32, i32) {
    %c3_i32 = arith.constant 3 : i32
    %0 = arith.muli %arg0, %c3_i32 : i32
    %1 = arith.addi %0, %arg1 : i32
    %c5_i32 = arith.constant 5 : i32
    %2 = arith.minsi %1, %c5_i32 : i32
    %c0_i32 = arith.constant 0 : i32
    %c0_i32_0 = arith.constant 0 : i32
    return %c0_i32, %2 : i32, i32
  }
  func.func @transform_1(%arg0: i32, %arg1: i32) -> (i32, i32) {
    %c3_i32 = arith.constant 3 : i32
    %0 = arith.muli %arg0, %c3_i32 : i32
    %1 = arith.addi %0, %arg1 : i32
    %c5_i32 = arith.constant 5 : i32
    %2 = arith.minsi %1, %c5_i32 : i32
    %c0_i32 = arith.constant 0 : i32
    %c0_i32_0 = arith.constant 0 : i32
    return %c0_i32, %2 : i32, i32
  }
  func.func @transform_2(%arg0: i32, %arg1: i32) -> (i32, i32, i32) {
    %c0_i32 = arith.constant 0 : i32
    %c0_i32_0 = arith.constant 0 : i32
    %c0_i32_1 = arith.constant 0 : i32
    return %arg0, %c0_i32, %c0_i32_0 : i32, i32, i32
  }
}

</mosaic_0001>

<llo_original>
// kernel: tpu_custom_call.1
$region0: #{tpu_custom_call.1}
  #allocation0 [shape = 'u32[]', space=smem, size = 0x4, offset = 0x4, fixed_abs, tag = 'smem constant byte address 0x4 - core index']
  #allocation1 [shape = 'u32[144,128]{1,0:T(1,128)}', space=vmem, size = 0x12000, scoped, tag = 'internal scratch']
  #allocation2 [shape = 's32[10,3]{1,0:T(8,128)}', space=vmem, size = 0x2000, scoped, tag = 'scratch operand']
  %s0 = inlined_call_operand.hbm [shape: s32[1,3000], index: 0, kind: input, shape index: {}]
  %s1 = inlined_call_operand.hbm [shape: s32[1,3000], index: 1, kind: input, shape index: {}]
  %s2 = inlined_call_operand.vmem [shape: s32[2,10,3], index: 2, kind: output, shape index: {}]
  %s3 = sld [smem:[#allocation0]]
  $region57: #{tpu_custom_call.1} parent=0
    _
  %s5 = ssub.s32 1, %s3
  %s6 = scalar_select 0, %s5, %s3
  $region1: #{tpu_custom_call.1} parent=0
    #allocation3 [shape = 'u8[4096]{0}', space=vmem, size = 0x1000, scoped, tag = 'input window, operand 0']
    #allocation4 [shape = 's32[2]{0}', space=sflag, size = 0x8, scoped, tag = 'scoped memory for tpu_custom_call.1']
    #allocation5 [shape = 'u8[4096]{0}', space=vmem, size = 0x1000, scoped, tag = 'input window, operand 1']
    #allocation6 [shape = 's32[2]{0}', space=sflag, size = 0x8, scoped, tag = 'scoped memory for tpu_custom_call.1']
    %7 = vsyncpa [#allocation4], 0
    %s8 = scalar_lea.sflag [#allocation4], 1
    %9 = vsyncpa %s8, 0
    %10 = vsyncpa [#allocation6], 0
    %s11 = scalar_lea.sflag [#allocation6], 1
    %12 = vsyncpa %s11, 0
    loop: start=0, step=1, limit=8
    $region2: #{tpu_custom_call.1} parent=1 // loop_pre_header
      _
    $region3: #{tpu_custom_call.1} parent=1 // loop_header
      %s14 = sphi 0, %s18
      %p15 = scmp.ge.s32.totalorder %s14, 8
      %s21 = sphi 0, %s33
      %s22 = sphi 0, %s29
      %s23 = sphi 0, %s21
      %s24 = sphi 0, %s22
      %s25 = sphi 0, %s23
      %s26 = sphi 0, %s24
      %s44 = sphi 0, %s46
      %s47 = sphi 0, %s44
      %s48 = sphi 0, %s47
      %s64 = sphi 0, %s48
      %s78 = sphi 0, %s80
      %s81 = sphi 0, %s78
      %s82 = sphi 0, %s81
      %s98 = sphi 0, %s82
      %s104 = sphi 0, %s106
      %s107 = sphi 0, %s104
      %s108 = sphi 0, %s107
      %s124 = sphi 0, %s108
    $region4: #{tpu_custom_call.1} parent=1 // loop_header_branch
      %17 = sbr.rel (%p15) target = $region8
    $region5: #{tpu_custom_call.1} parent=1 // loop_body
      %s19 = ssub.s32 %s14, 1
      %s20 = ssub.s32 %s14, 2
      %s27 = sadd.s32 1, %s22
      %p28 = scmp.ge.s32.totalorder %s27, 3
      %s29 = scalar_select %p28, 0, %s27
      %s30 = sadd.s32 1, %s21
      %s31 = scalar_select %p28, %s30, %s21
      %p32 = scmp.ge.s32.totalorder %s31, 2
      %s33 = scalar_select %p32, 0, %s31
      %s34 = smul.u32 %s21, 3
      %s35 = sadd.s32 %s34, %s22
      %p36 = scmp.lt.s32.totalorder %s35, 5
      %s37 = scalar_select %p36, %s35, 5
      %s38 = smul.u32 %s33, 3
      %s39 = sadd.s32 %s38, %s29
      %p40 = scmp.lt.s32.totalorder %s39, 5
      %s41 = scalar_select %p40, %s39, 5
      %s42 = ssub.s32 %s37, %s41
      %p43 = scmp.eq.s32.totalorder %s42, 0
      %s45 = sadd.s32 %s44, 1
      %s46 = scalar_select %p43, %s44, %s45
      %p49 = pneg %p43
      %p50 = scmp.eq.s32.totalorder %s14, 5
      %p51 = por %p49, %p50
      %p52 = scmp.ne.s32.totalorder %s44, %s47
      %p53 = scmp.eq.s32.totalorder %s14, 0
      %p54 = por %p52, %p53
      %p55 = scmp.ne.s32.totalorder %s44, %s47
      %p56 = scmp.eq.s32.totalorder %s19, 5
      %p57 = por %p55, %p56
      %p58 = scmp.ne.s32.totalorder %s47, %s48
      %p59 = scmp.eq.s32.totalorder %s19, 0
      %p60 = por %p58, %p59
      %p61 = scmp.ne.s32.totalorder %s47, %s48
      %p62 = scmp.eq.s32.totalorder %s20, 5
      %p63 = por %p61, %p62
      %p65 = scmp.ne.s32.totalorder %s48, %s64
      %p66 = scmp.eq.s32.totalorder %s20, 0
      %p67 = por %p65, %p66
      %s68 = smul.u32 %s21, 3
      %s69 = sadd.s32 %s68, %s22
      %p70 = scmp.lt.s32.totalorder %s69, 5
      %s71 = scalar_select %p70, %s69, 5
      %s72 = smul.u32 %s33, 3
      %s73 = sadd.s32 %s72, %s29
      %p74 = scmp.lt.s32.totalorder %s73, 5
      %s75 = scalar_select %p74, %s73, 5
      %s76 = ssub.s32 %s71, %s75
      %p77 = scmp.eq.s32.totalorder %s76, 0
      %s79 = sadd.s32 %s78, 1
      %s80 = scalar_select %p77, %s78, %s79
      %p83 = pneg %p77
      %p84 = scmp.eq.s32.totalorder %s14, 5
      %p85 = por %p83, %p84
      %p86 = scmp.ne.s32.totalorder %s78, %s81
      %p87 = scmp.eq.s32.totalorder %s14, 0
      %p88 = por %p86, %p87
      %p89 = scmp.ne.s32.totalorder %s78, %s81
      %p90 = scmp.eq.s32.totalorder %s19, 5
      %p91 = por %p89, %p90
      %p92 = scmp.ne.s32.totalorder %s81, %s82
      %p93 = scmp.eq.s32.totalorder %s19, 0
      %p94 = por %p92, %p93
      %p95 = scmp.ne.s32.totalorder %s81, %s82
      %p96 = scmp.eq.s32.totalorder %s20, 5
      %p97 = por %p95, %p96
      %p99 = scmp.ne.s32.totalorder %s82, %s98
      %p100 = scmp.eq.s32.totalorder %s20, 0
      %p101 = por %p99, %p100
      %s102 = ssub.s32 %s21, %s33
      %p103 = scmp.eq.s32.totalorder %s102, 0
      %s105 = sadd.s32 %s104, 1
      %s106 = scalar_select %p103, %s104, %s105
      %p109 = pneg %p103
      %p110 = scmp.eq.s32.totalorder %s14, 5
      %p111 = por %p109, %p110
      %p112 = scmp.ne.s32.totalorder %s104, %s107
      %p113 = scmp.eq.s32.totalorder %s14, 0
      %p114 = por %p112, %p113
      %p115 = scmp.ne.s32.totalorder %s104, %s107
      %p116 = scmp.eq.s32.totalorder %s19, 5
      %p117 = por %p115, %p116
      %p118 = scmp.ne.s32.totalorder %s107, %s108
      %p119 = scmp.eq.s32.totalorder %s19, 0
      %p120 = por %p118, %p119
      %p121 = scmp.ne.s32.totalorder %s107, %s108
      %p122 = scmp.eq.s32.totalorder %s20, 5
      %p123 = por %p121, %p122
      %p125 = scmp.ne.s32.totalorder %s108, %s124
      %p126 = scmp.eq.s32.totalorder %s20, 0
      %p127 = por %p125, %p126
      %p128 = scmp.le.s32.totalorder 1, %s14
      %p129 = scmp.lt.s32.totalorder %s14, 7
      %p130 = pnand %p128, %p129
      %p131 = pneg %p130
      // Predicated region
      $region9: #{tpu_custom_call.1} parent=5 // pred_check
        _
      $region10: #{tpu_custom_call.1} parent=5 // pred_check_branch
        %133 = sbr.rel (%p130) target = $region12
      $region11: #{tpu_custom_call.1} parent=5 // pred_region
        %s134 = ssub.s32 %s14, 1
      $region12: #{tpu_custom_call.1} parent=5 // pred_fallthru
        _
      %p135 = scmp.lt.s32.totalorder %s14, 6
      // Predicated region
      $region13: #{tpu_custom_call.1} parent=5 // pred_check
        %p136 = pneg %p135
      $region14: #{tpu_custom_call.1} parent=5 // pred_check_branch
        %138 = sbr.rel (%p136) target = $region16
      $region15: #{tpu_custom_call.1} parent=5 // pred_region
        // Predicated region
        $region17: #{tpu_custom_call.1} parent=15 // pred_check
          %p139 = pneg %p54
        $region18: #{tpu_custom_call.1} parent=15 // pred_check_branch
          %141 = sbr.rel (%p139) target = $region20
        $region19: #{tpu_custom_call.1} parent=15 // pred_region
          %s142 = sand.u32 %s44, 1
          %s143 = scalar_lea.sflag [#allocation4], %s142
          %s144 = sand.u32 %s44, 1
          %s145 = smul.addr %s144, 4
          %s146 = scalar_lea.vmem [#allocation3], %s145
          %s147 = smul.u32 %s21, 3
          %s148 = sadd.s32 %s147, %s22
          %p149 = scmp.lt.s32.totalorder %s148, 5
          %s150 = scalar_select %p149, %s148, 5
          %s151 = smul.u32 4, %s150
          %s153 = ssub.s32 64, 64
          %154 = vsyncadd %s143, %s153
          %s155 = smul.addr %s151, 16
          %s156 = scalar_lea.hbm %s0, %s155
          %s158 = sshll.u32 %s146, 4
          %s159 = int_to_ptr.vmem [resolvable:$true] %s158
          %161 = dma.hbm_to_vmem [thread:$0]  %s156, 64, %s159, %s143
        $region20: #{tpu_custom_call.1} parent=15 // pred_fallthru
          _
        // Predicated region
        $region21: #{tpu_custom_call.1} parent=15 // pred_check
          %p162 = pneg %p88
        $region22: #{tpu_custom_call.1} parent=15 // pred_check_branch
          %164 = sbr.rel (%p162) target = $region24
        $region23: #{tpu_custom_call.1} parent=15 // pred_region
          %s165 = sand.u32 %s78, 1
          %s166 = scalar_lea.sflag [#allocation6], %s165
          %s167 = sand.u32 %s78, 1
          %s168 = smul.addr %s167, 4
          %s169 = scalar_lea.vmem [#allocation5], %s168
          %s170 = smul.u32 %s21, 3
          %s171 = sadd.s32 %s170, %s22
          %p172 = scmp.lt.s32.totalorder %s171, 5
          %s173 = scalar_select %p172, %s171, 5
          %s174 = smul.u32 4, %s173
          %s176 = ssub.s32 64, 64
          %177 = vsyncadd %s166, %s176
          %s178 = smul.addr %s174, 16
          %s179 = scalar_lea.hbm %s1, %s178
          %s181 = sshll.u32 %s169, 4
          %s182 = int_to_ptr.vmem [resolvable:$true] %s181
          %184 = dma.hbm_to_vmem [thread:$0]  %s179, 64, %s182, %s166
        $region24: #{tpu_custom_call.1} parent=15 // pred_fallthru
          _
      $region16: #{tpu_custom_call.1} parent=5 // pred_fallthru
        _
      %p185 = scmp.le.s32.totalorder 1, %s14
      %p186 = scmp.lt.s32.totalorder %s14, 7
      %p187 = pnand %p185, %p186
      %p188 = pneg %p187
      // Predicated region
      $region25: #{tpu_custom_call.1} parent=5 // pred_check
        _
      $region26: #{tpu_custom_call.1} parent=5 // pred_check_branch
        %190 = sbr.rel (%p187) target = $region28
      $region27: #{tpu_custom_call.1} parent=5 // pred_region
        %s191 = ssub.s32 %s14, 1
        %s192 = sand.u32 %s47, 1
        %s193 = scalar_lea.sflag [#allocation4], %s192
        %s194 = sand.u32 %s47, 1
        %s195 = smul.addr %s194, 4
        %s196 = scalar_lea.vmem [#allocation3], %s195
        // Predicated region
        $region29: #{tpu_custom_call.1} parent=27 // pred_check
          %p197 = pneg %p60
        $region30: #{tpu_custom_call.1} parent=27 // pred_check_branch
          %199 = sbr.rel (%p197) target = $region32
        $region31: #{tpu_custom_call.1} parent=27 // pred_region
          %200 = dma.done %s193, 64
        $region32: #{tpu_custom_call.1} parent=27 // pred_fallthru
          _
        %s201 = sand.u32 %s81, 1
        %s202 = scalar_lea.sflag [#allocation6], %s201
        %s203 = sand.u32 %s81, 1
        %s204 = smul.addr %s203, 4
        %s205 = scalar_lea.vmem [#allocation5], %s204
        // Predicated region
        $region33: #{tpu_custom_call.1} parent=27 // pred_check
          %p206 = pneg %p94
        $region34: #{tpu_custom_call.1} parent=27 // pred_check_branch
          %208 = sbr.rel (%p206) target = $region36
        $region35: #{tpu_custom_call.1} parent=27 // pred_region
          %209 = dma.done %s202, 64
        $region36: #{tpu_custom_call.1} parent=27 // pred_fallthru
          _
        %s210 = sand.u32 %s47, 1
        %s211 = scalar_lea.sflag [#allocation4], %s210
        %s212 = sand.u32 %s47, 1
        %s213 = smul.addr %s212, 4
        %s214 = scalar_lea.vmem [#allocation3], %s213
        %p215 = pneg %p60
        %p216 = pneg %p57
        %s217 = sand.u32 %s81, 1
        %s218 = scalar_lea.sflag [#allocation6], %s217
        %s219 = sand.u32 %s81, 1
        %s220 = smul.addr %s219, 4
        %s221 = scalar_lea.vmem [#allocation5], %s220
        %p222 = pneg %p94
        %p223 = pneg %p91
        %p224 = pneg %p120
        %p225 = pneg %p117
        %p226 = scmp.lt.s32.totalorder %s23, 1
        %s227 = scalar_select %p226, %s23, 1
        %s228 = smul.addr %s227, 2
        %s229 = smul.addr %s228, 8
        %s230 = scalar_lea.vmem %s2, %s229
        %s231 = smul.u32 %s23, 3
        %s232 = sadd.s32 %s231, %s24
        %p233 = scmp.lt.s32.totalorder %s232, 5
        %s234 = scalar_select %p233, %s232, 5
        %s235 = smul.u32 4, %s234
        %s236 = smul.u32 %s23, 3
        %s237 = sadd.s32 %s236, %s24
        %p238 = scmp.lt.s32.totalorder %s237, 5
        %s239 = scalar_select %p238, %s237, 5
        %s240 = smul.u32 4, %s239
        %p241 = scmp.lt.s32.totalorder %s23, 1
        %s242 = scalar_select %p241, %s23, 1
        %s243 = smul.addr %s242, 2
        %s244 = smul.addr %s243, 8
        %s245 = scalar_lea.vmem %s2, %s244
        %p246 = scmp.eq.s32.totalorder %s24, 0
        // Predicated region
        $region37: #{tpu_custom_call.1} parent=27 // pred_check
          %p247 = pneg %p246
        $region38: #{tpu_custom_call.1} parent=27 // pred_check_branch
          %249 = sbr.rel (%p247) target = $region40
        $region39: #{tpu_custom_call.1} parent=27 // pred_region
          %vm250 = vcmask 23552
          %251 = vst.msk [vmem:[#allocation2] sm:$0xff] %vm250, 0
          %vm252 = vcmask 17408
          %253 = vst.msk [vmem:[#allocation2 + $0x8] sm:$0x3] %vm252, 0
        $region40: #{tpu_custom_call.1} parent=27 // pred_fallthru
          _
        %s254 = smul.u32 %s23, 3
        %s255 = sadd.s32 %s254, %s24
        %s256 = smul.u32 %s255, 512
        %v257 = vlaneseq
        %v258 = vand.u32 %v257, 127
        %v259 = vadd.s32 %v258, 128
        %v260 = vadd.s32 %v258, 256
        %v261 = vadd.s32 %v258, 384
        %v262 = vstv %s256
        %v263 = vadd.s32 %v262, %v258
        %v264 = vadd.s32 %v262, %v259
        %v265 = vadd.s32 %v262, %v260
        %v266 = vadd.s32 %v262, %v261
        %vm267 = vcmp.lt.s32.totalorder %v263, 3000
        %vm268 = vcmp.lt.s32.totalorder %v264, 3000
        %vm269 = vcmp.lt.s32.totalorder %v265, 3000
        %vm270 = vcmp.lt.s32.totalorder %v266, 3000
        %v271 = vlaneseq
        %v272 = vshrl.u32 %v271, 7
        %v273 = vadd.s32 %v272, 8
        %v274 = vld [vmem:[%s196] sm:$0xf]
        %v275 = vlaneseq
        %v276 = vshrl.u32 %v275, 7
        %v277 = vsub.s32 0, %v276
        %v278 = vrot.slane %v274, %v277
        %v279 = vlaneseq
        %v280 = vshrl.u32 %v279, 7
        %v281 = vsub.s32 1, %v280
        %v282 = vrot.slane %v274, %v281
        %v283 = vlaneseq
        %v284 = vshrl.u32 %v283, 7
        %v285 = vsub.s32 2, %v284
        %v286 = vrot.slane %v274, %v285
        %v287 = vlaneseq
        %v288 = vshrl.u32 %v287, 7
        %v289 = vsub.s32 3, %v288
        %v290 = vrot.slane %v274, %v289
        %vm291 = vcmp.eq.s32.totalorder %v278, %v272
        %vm292 = vcmp.eq.s32.totalorder %v282, %v272
        %vm293 = vcmp.eq.s32.totalorder %v286, %v272
        %vm294 = vcmp.eq.s32.totalorder %v290, %v272
        %vm295 = vcmp.eq.s32.totalorder %v278, %v273
        %vm296 = vcmp.eq.s32.totalorder %v282, %v273
        %vm297 = vcmp.eq.s32.totalorder %v286, %v273
        %vm298 = vcmp.eq.s32.totalorder %v290, %v273
        %v299 = vsel %vm267, 1, 0
        %v300 = vsel %vm268, 1, 0
        %v301 = vsel %vm269, 1, 0
        %v302 = vsel %vm270, 1, 0
        %vm303 = vcmp.eq.s32.totalorder %v299, 1
        %vm304 = vcmp.eq.s32.totalorder %v300, 1
        %vm305 = vcmp.eq.s32.totalorder %v301, 1
        %vm306 = vcmp.eq.s32.totalorder %v302, 1
        %vm307 = vmand %vm291, %vm303
        %vm308 = vmand %vm292, %vm304
        %vm309 = vmand %vm293, %vm305
        %vm310 = vmand %vm294, %vm306
        %vm311 = vmand %vm295, %vm303
        %vm312 = vmand %vm296, %vm304
        %vm313 = vmand %vm297, %vm305
        %vm314 = vmand %vm298, %vm306
        %v315 = vld [vmem:[%s205] sm:$0xf]
        %v316 = vlaneseq
        %v317 = vshrl.u32 %v316, 7
        %v318 = vsub.s32 0, %v317
        %v319 = vrot.slane %v315, %v318
        %v320 = vlaneseq
        %v321 = vshrl.u32 %v320, 7
        %v322 = vsub.s32 1, %v321
        %v323 = vrot.slane %v315, %v322
        %v324 = vlaneseq
        %v325 = vshrl.u32 %v324, 7
        %v326 = vsub.s32 2, %v325
        %v327 = vrot.slane %v315, %v326
        %v328 = vlaneseq
        %v329 = vshrl.u32 %v328, 7
        %v330 = vsub.s32 3, %v329
        %v331 = vrot.slane %v315, %v330
        %vm332 = vcmp.eq.s32.totalorder %v319, %v272
        %vm333 = vcmp.eq.s32.totalorder %v323, %v272
        %vm334 = vcmp.eq.s32.totalorder %v327, %v272
        %vm335 = vcmp.eq.s32.totalorder %v331, %v272
        %vm336 = vcmp.eq.s32.totalorder %v319, %v273
        %vm337 = vcmp.eq.s32.totalorder %v323, %v273
        %vm338 = vcmp.eq.s32.totalorder %v327, %v273
        %vm339 = vcmp.eq.s32.totalorder %v331, %v273
        %vm340 = vmand %vm332, %vm303
        %vm341 = vmand %vm333, %vm304
        %vm342 = vmand %vm334, %vm305
        %vm343 = vmand %vm335, %vm306
        %vm344 = vmand %vm336, %vm303
        %vm345 = vmand %vm337, %vm304
        %vm346 = vmand %vm338, %vm305
        %vm347 = vmand %vm339, %vm306
        %vm348 = vmand %vm307, %vm340
        %vm349 = vmand %vm308, %vm341
        %vm350 = vmand %vm309, %vm342
        %vm351 = vmand %vm310, %vm343
        %vm352 = vmand %vm311, %vm344
        %vm353 = vmand %vm312, %vm345
        %vm354 = vmand %vm313, %vm346
        %vm355 = vmand %vm314, %vm347
        %v356 = vsel %vm348, 1, 0
        %v357 = vsel %vm349, 1, 0
        %v358 = vsel %vm350, 1, 0
        %v359 = vsel %vm351, 1, 0
        %v360 = vsel %vm352, 1, 0
        %v361 = vsel %vm353, 1, 0
        %v362 = vsel %vm354, 1, 0
        %v363 = vsel %vm355, 1, 0
        %v364 = vadd.s32 %v356, %v358
        %v365 = vadd.s32 %v357, %v359
        %v366 = vadd.s32 %v364, %v365
        %v367 = vand.u32 %v366, 65535
        %v368 = vshrl.u32 %v366, 16
        %v369 = vcvt.s32.f32 %v367
        %v370 = vcvt.s32.f32 %v368
        %371 = vadd.xlane.f32.xlu0 %v369
        %v372 = vpop.xlane.xlu0 %371
        %373 = vadd.xlane.f32.xlu0 %v370
        %v374 = vpop.xlane.xlu0 %373
        %v375 = vcvt.f32.s32 %v372
        %v376 = vcvt.f32.s32 %v374
        %v377 = vshll.u32 %v376, 16
        %v378 = vadd.s32 %v377, %v375
        %vm379 = vcmask 1041408
        %v380 = vsel %vm379, %v360, 0
        %v381 = vsel %vm379, %v361, 0
        %v382 = vsel %vm379, %v362, 0
        %v383 = vadd.s32 %v380, %v382
        %v384 = vsel %vm379, %v363, 0
        %v385 = vadd.s32 %v381, %v384
        %v386 = vadd.s32 %v383, %v385
        %v387 = vand.u32 %v386, 65535
        %v388 = vshrl.u32 %v386, 16
        %v389 = vcvt.s32.f32 %v387
        %v390 = vcvt.s32.f32 %v388
        %391 = vadd.xlane.f32.xlu0 %v389
        %v392 = vpop.xlane.xlu0 %391
        %393 = vadd.xlane.f32.xlu0 %v390
        %v394 = vpop.xlane.xlu0 %393
        %v395 = vcvt.f32.s32 %v392
        %v396 = vcvt.f32.s32 %v394
        %v397 = vshll.u32 %v396, 16
        %v398 = vadd.s32 %v397, %v395
        %v399 = vsel %vm340, 1, 0
        %v400 = vsel %vm341, 1, 0
        %v401 = vsel %vm342, 1, 0
        %v402 = vsel %vm343, 1, 0
        %v403 = vsel %vm344, 1, 0
        %v404 = vsel %vm345, 1, 0
        %v405 = vsel %vm346, 1, 0
        %v406 = vsel %vm347, 1, 0
        %v407 = vadd.s32 %v399, %v401
        %v408 = vadd.s32 %v400, %v402
        %v409 = vadd.s32 %v407, %v408
        %v410 = vand.u32 %v409, 65535
        %v411 = vshrl.u32 %v409, 16
        %v412 = vcvt.s32.f32 %v410
        %v413 = vcvt.s32.f32 %v411
        %414 = vadd.xlane.f32.xlu0 %v412
        %v415 = vpop.xlane.xlu0 %414
        %416 = vadd.xlane.f32.xlu0 %v413
        %v417 = vpop.xlane.xlu0 %416
        %v418 = vcvt.f32.s32 %v415
        %v419 = vcvt.f32.s32 %v417
        %v420 = vshll.u32 %v419, 16
        %v421 = vadd.s32 %v420, %v418
        %v422 = vsel %vm379, %v403, 0
        %v423 = vsel %vm379, %v404, 0
        %v424 = vsel %vm379, %v405, 0
        %v425 = vadd.s32 %v422, %v424
        %v426 = vsel %vm379, %v406, 0
        %v427 = vadd.s32 %v423, %v426
        %v428 = vadd.s32 %v425, %v427
        %v429 = vand.u32 %v428, 65535
        %v430 = vshrl.u32 %v428, 16
        %v431 = vcvt.s32.f32 %v429
        %v432 = vcvt.s32.f32 %v430
        %433 = vadd.xlane.f32.xlu0 %v431
        %v434 = vpop.xlane.xlu0 %433
        %435 = vadd.xlane.f32.xlu0 %v432
        %v436 = vpop.xlane.xlu0 %435
        %v437 = vcvt.f32.s32 %v434
        %v438 = vcvt.f32.s32 %v436
        %v439 = vshll.u32 %v438, 16
        %v440 = vadd.s32 %v439, %v437
        %v441 = vsel %vm307, 1, 0
        %v442 = vsel %vm308, 1, 0
        %v443 = vsel %vm309, 1, 0
        %v444 = vsel %vm310, 1, 0
        %v445 = vsel %vm311, 1, 0
        %v446 = vsel %vm312, 1, 0
        %v447 = vsel %vm313, 1, 0
        %v448 = vsel %vm314, 1, 0
        %v449 = vadd.s32 %v441, %v443
        %v450 = vadd.s32 %v442, %v444
        %v451 = vadd.s32 %v449, %v450
        %v452 = vand.u32 %v451, 65535
        %v453 = vshrl.u32 %v451, 16
        %v454 = vcvt.s32.f32 %v452
        %v455 = vcvt.s32.f32 %v453
        %456 = vadd.xlane.f32.xlu0 %v454
        %v457 = vpop.xlane.xlu0 %456
        %458 = vadd.xlane.f32.xlu0 %v455
        %v459 = vpop.xlane.xlu0 %458
        %v460 = vcvt.f32.s32 %v457
        %v461 = vcvt.f32.s32 %v459
        %v462 = vshll.u32 %v461, 16
        %v463 = vadd.s32 %v462, %v460
        %v464 = vsel %vm379, %v445, 0
        %v465 = vsel %vm379, %v446, 0
        %v466 = vsel %vm379, %v447, 0
        %v467 = vadd.s32 %v464, %v466
        %v468 = vsel %vm379, %v448, 0
        %v469 = vadd.s32 %v465, %v468
        %v470 = vadd.s32 %v467, %v469
        %v471 = vand.u32 %v470, 65535
        %v472 = vshrl.u32 %v470, 16
        %v473 = vcvt.s32.f32 %v471
        %v474 = vcvt.s32.f32 %v472
        %475 = vadd.xlane.f32.xlu0 %v473
        %v476 = vpop.xlane.xlu0 %475
        %477 = vadd.xlane.f32.xlu0 %v474
        %v478 = vpop.xlane.xlu0 %477
        %v479 = vcvt.f32.s32 %v476
        %v480 = vcvt.f32.s32 %v478
        %v481 = vshll.u32 %v480, 16
        %v482 = vadd.s32 %v481, %v479
        %v483 = vld [vmem:[#allocation2] sm:$0xff]
        %v484 = vld [vmem:[#allocation2 + $0x8] sm:$0x3]
        %vm485 = vcmp.eq.s32.totalorder %v258, 0
        %vm486 = vcmp.eq.s32.totalorder %v258, 1
        %v487 = vsel %vm486, %v421, %v463
        %v488 = vsel %vm486, %v440, %v482
        %v489 = vsel %vm485, %v378, %v487
        %v490 = vsel %vm485, %v398, %v488
        %v491 = vadd.s32 %v483, %v489
        %v492 = vadd.s32 %v484, %v490
        %vm493 = vcmask 23552
        %494 = vst.msk [vmem:[#allocation2] sm:$0xff] %vm493, %v491
        %vm495 = vcmask 17408
        %496 = vst.msk [vmem:[#allocation2 + $0x8] sm:$0x3] %vm495, %v492
        %p497 = scmp.eq.s32.totalorder %s24, 2
        // Predicated region
        $region41: #{tpu_custom_call.1} parent=27 // pred_check
          %p498 = pneg %p497
        $region42: #{tpu_custom_call.1} parent=27 // pred_check_branch
          %500 = sbr.rel (%p498) target = $region44
        $region43: #{tpu_custom_call.1} parent=27 // pred_region
          %v501 = vld [vmem:[#allocation2] sm:$0xff]
          %v502 = vld [vmem:[#allocation2 + $0x8] sm:$0x3]
          %503 = vst.msk [vmem:[%s245] sm:$0xff] %vm493, %v501
          %504 = vst.msk [vmem:[%s245 + $0x8] sm:$0x3] %vm495, %v502
        $region44: #{tpu_custom_call.1} parent=27 // pred_fallthru
          _
        %p505 = scmp.lt.s32.totalorder %s23, 1
        %s506 = scalar_select %p505, %s23, 1
        %s507 = smul.addr %s506, 2
        %s508 = smul.addr %s507, 8
        %s509 = scalar_lea.vmem %s2, %s508
        // Predicated region
        $region45: #{tpu_custom_call.1} parent=27 // pred_check
          %p510 = pneg %p117
        $region46: #{tpu_custom_call.1} parent=27 // pred_check_branch
          %512 = sbr.rel (%p510) target = $region48
        $region47: #{tpu_custom_call.1} parent=27 // pred_region
          _
        $region48: #{tpu_custom_call.1} parent=27 // pred_fallthru
          _
      $region28: #{tpu_custom_call.1} parent=5 // pred_fallthru
        _
      %p513 = scmp.le.s32.totalorder 2, %s14
      // Predicated region
      $region49: #{tpu_custom_call.1} parent=5 // pred_check
        %p514 = pneg %p513
      $region50: #{tpu_custom_call.1} parent=5 // pred_check_branch
        %516 = sbr.rel (%p514) target = $region52
      $region51: #{tpu_custom_call.1} parent=5 // pred_region
        %s517 = ssub.s32 %s14, 2
        // Predicated region
        $region53: #{tpu_custom_call.1} parent=51 // pred_check
          %p518 = pneg %p123
        $region54: #{tpu_custom_call.1} parent=51 // pred_check_branch
          %520 = sbr.rel (%p518) target = $region56
        $region55: #{tpu_custom_call.1} parent=51 // pred_region
          %p521 = scmp.lt.s32.totalorder %s25, 1
          %s522 = scalar_select %p521, %s25, 1
          %s523 = smul.addr %s522, 2
          %s524 = smul.addr %s523, 8
          %s525 = scalar_lea.vmem %s2, %s524
        $region56: #{tpu_custom_call.1} parent=51 // pred_fallthru
          _
      $region52: #{tpu_custom_call.1} parent=5 // pred_fallthru
        _
    $region6: #{tpu_custom_call.1} parent=1 // loop_footer
      %s18 = sadd.s32 1, %s14
    $region7: #{tpu_custom_call.1} parent=1 // loop_footer_branch
      %13 = sbr.rel target = $region3
    $region8: #{tpu_custom_call.1} parent=1 // loop_exit
      _
    %526 = vsyncpa [#allocation4], 1
    %s527 = scalar_lea.sflag [#allocation4], 1
    %528 = vsyncpa %s527, 1
    %529 = vsyncpa [#allocation6], 1
    %s530 = scalar_lea.sflag [#allocation6], 1
    %531 = vsyncpa %s530, 1

</llo_original>
